<compile_context>
chip_gen: v5e
topology: v5e:2x2
jax: 0.10.0
libtpu: 0.0.40
codegen_flags: <defaults>
</compile_context>

<pallas_src>
import jax
import jax.numpy as jnp
from jax import lax
from jax.experimental import pallas as pl
from jax.experimental.pallas import tpu as pltpu


def _round_up(x, m):
    return (x + m - 1) // m * m


def _choose_seq_tile(s_pad, max_tile=1024, align=16):
    """Largest tile <= max_tile, multiple of `align`, dividing s_pad."""
    ts = min(max_tile, s_pad)
    ts -= ts % align
    ts = max(ts, align)
    while s_pad % ts:
        ts -= align
    return ts


# ----------------------------------------------------------------------------
# Pallas kernel: fused embedding-gather + LayerNorm + Linear projection
# ----------------------------------------------------------------------------
def _embed_ln_proj_kernel(ids_ref,              # SMEM  (B*S_pad,) int32 (scalar prefetch)
                          tok_ref,              # VMEM  (Vp, Hm)  f32   (resident table)
                          pos_ref,              # VMEM  (ts, Hm)  bf16
                          gamma_ref, beta_ref,  # VMEM  (1, Hm)   f32
                          w_ref,                # VMEM  (Hm, Ho)  bf16
                          b_ref,                # VMEM  (1, Ho)   f32
                          hid_ref,              # out   (ts, Hm)  bf16
                          proj_ref,             # out   (ts, Ho)  bf16
                          tok_buf):             # VMEM scratch (ts, Hm) f32
    ts = tok_buf.shape[0]
    j = pl.program_id(0)                         # seq-tile index
    b = pl.program_id(1)                         # batch index
    nt = pl.num_programs(0)
    base = (b * nt + j) * ts                     # flat row offset into ids

    # ---- token-embedding gather: ts in-VMEM row copies from the resident ----
    # ---- table (no HBM DMAs; chunked loop, 8-row unrolled body) --------------
    rows_per_chunk = 8

    def gather_chunk(c, carry):
        t0 = pl.multiple_of(c * rows_per_chunk, rows_per_chunk)
        for u in range(rows_per_chunk):
            t = t0 + u
            row = ids_ref[base + t]
            tok_buf[pl.ds(t, 1), :] = tok_ref[pl.ds(row, 1), :]
        return carry

    lax.fori_loop(0, ts // rows_per_chunk, gather_chunk, 0)

    # ---- LayerNorm over the hidden (lane) axis, f32 math, folded affine -----
    x = tok_buf[...] + pos_ref[...].astype(jnp.float32)
    mu = jnp.mean(x, axis=-1, keepdims=True)
    centered = x - mu
    var = jnp.mean(centered * centered, axis=-1, keepdims=True)
    scale = lax.rsqrt(var + 1e-12) * gamma_ref[...]
    hn = centered * scale + beta_ref[...]
    hid_ref[...] = hn.astype(hid_ref.dtype)

    # ---- projection: bf16 MXU matmul, f32 accumulate, bias add --------------
    proj = jnp.dot(hn.astype(jnp.bfloat16), w_ref[...],
                   preferred_element_type=jnp.float32)
    proj = proj + b_ref[...]
    proj_ref[...] = proj.astype(proj_ref.dtype)
    # TODO(synk): training-mode dropout (stochastic) not implemented; eval-mode
    # dropout is the identity, which is what is applied here.


def fused_embed_layernorm_projection(ids_flat, tok_table, pos, gamma, beta,
                                     w, bias, *, batch, s_pad, ts,
                                     out_dtype=jnp.bfloat16):
    """ids_flat: [B*S_pad] int32 -> (hidden [B*S_pad,Hm], projected [B*S_pad,Ho])."""
    vpad, hm = tok_table.shape
    ho = w.shape[1]
    nt = s_pad // ts
    n = batch * s_pad
    grid = (nt, batch)

    out_bytes = jnp.dtype(out_dtype).itemsize
    cost = pl.CostEstimate(
        flops=int(2 * n * hm * ho + 10 * n * hm),
        transcendentals=int(n),
        bytes_accessed=int(
            vpad * hm * 4                    # token table: read once (VMEM-resident)
            + s_pad * hm * 2                 # pos tiles (bf16), once per seq tile
            + n * 4                          # input ids (SMEM prefetch)
            + hm * ho * 2 + ho * 4 + 2 * hm * 4   # W / bias / gamma / beta
            + n * (hm + ho) * out_bytes))    # bf16 outputs

    # Rough VMEM footprint: resident table (+pipeline copy), double-buffered
    # pos / W / output tiles, scratch.  Clamp into a range that is safe on
    # v5e/v6e (128 MiB) and v7x (64 MiB physical).
    vmem_est = (2 * vpad * hm * 4 + 2 * ts * hm * 2 + 2 * hm * ho * 2
                + 2 * ts * (hm + ho) * out_bytes + ts * hm * 4 + (2 << 20))
    vmem_limit = int(min(56 * 2**20, max(32 * 2**20, vmem_est)))

    out_shapes = (
        jax.ShapeDtypeStruct((n, hm), out_dtype),
        jax.ShapeDtypeStruct((n, ho), out_dtype),
    )

    return pl.pallas_call(
        _embed_ln_proj_kernel,
        out_shape=out_shapes,
        grid_spec=pltpu.PrefetchScalarGridSpec(
            num_scalar_prefetch=1,          # input_ids -> SMEM
            grid=grid,
            in_specs=[
                # Full-extent, constant index_map -> table stays VMEM-resident.
                pl.BlockSpec((vpad, hm), lambda j, b, ids: (0, 0)),
                # Pos block index constant across the inner batch axis.
                pl.BlockSpec((ts, hm), lambda j, b, ids: (j, 0)),
                pl.BlockSpec((1, hm), lambda j, b, ids: (0, 0)),    # gamma
                pl.BlockSpec((1, hm), lambda j, b, ids: (0, 0)),    # beta
                pl.BlockSpec((hm, ho), lambda j, b, ids: (0, 0)),   # W (bf16)
                pl.BlockSpec((1, ho), lambda j, b, ids: (0, 0)),    # bias
            ],
            out_specs=[
                pl.BlockSpec((ts, hm), lambda j, b, ids: (b * nt + j, 0)),
                pl.BlockSpec((ts, ho), lambda j, b, ids: (b * nt + j, 0)),
            ],
            scratch_shapes=[
                pltpu.VMEM((ts, hm), jnp.float32),   # gathered token rows
            ],
        ),
        compiler_params=pltpu.CompilerParams(
            dimension_semantics=("parallel", "parallel"),
            vmem_limit_bytes=vmem_limit),
        cost_estimate=cost,
    )(ids_flat, tok_table, pos, gamma, beta, w, bias)


# ----------------------------------------------------------------------------
# LLMEmbedding forward (JAX wrapper around the Pallas kernel)
# ----------------------------------------------------------------------------
class LLMEmbeddingPallas:
    """JAX/Pallas stand-in for LLMEmbedding (shared_projection=True, eval)."""

    def __init__(self, key, *, vocab_size, max_seq_len, model_hidden_size,
                 hidden_size, out_dtype=jnp.bfloat16):
        self.model_hidden_size = model_hidden_size
        self.hidden_size = hidden_size
        self.out_dtype = out_dtype
        k_tok, k_pos, k_w, k_b = jax.random.split(key, 4)
        # Synthetic (deterministic) encoder-stub parameters.
        vpad = _round_up(vocab_size, 8)
        tok = jax.random.normal(
            k_tok, (vpad, model_hidden_size), jnp.float32) * 0.02
        self.tok_emb = tok                                       # f32 (see TODO above)
        self.pos_emb = (jax.random.normal(
            k_pos, (max_seq_len, model_hidden_size), jnp.float32)
            * 0.02).astype(jnp.bfloat16)
        self.ln_gamma = jnp.ones((1, model_hidden_size), jnp.float32)
        self.ln_beta = jnp.zeros((1, model_hidden_size), jnp.float32)
        # nn.Linear(model_hidden_size, hidden_size): stored [in, out]; weight
        # kept in bf16 so the kernel feeds the MXU natively.
        bound = 1.0 / (model_hidden_size ** 0.5)
        self.proj_w = jax.random.uniform(
            k_w, (model_hidden_size, hidden_size), jnp.float32,
            minval=-bound, maxval=bound).astype(jnp.bfloat16)
        self.proj_b = jax.random.uniform(
            k_b, (1, hidden_size), jnp.float32, minval=-bound, maxval=bound)

    def __call__(self, input_ids, attention_mask, domain_id=None):
        # attention_mask kept for API parity; as in the reference forward it
        # does not mask the returned hidden states (masking is internal to the
        # HF encoder, which this stub replaces).
        # TODO(synk): domain_adapter path (domain_adaptation=False) not implemented.
        del attention_mask, domain_id
        b, s = input_ids.shape
        s_pad = _round_up(s, 16)
        ts = _choose_seq_tile(s_pad)
        # The ids are scalar-prefetched into SMEM (1D int32); guard its size.
        assert b * s_pad <= 65536, "input_ids too large for SMEM scalar prefetch"

        ids = input_ids.astype(jnp.int32)
        pos = self.pos_emb[:s]
        if s_pad != s:
            ids = jnp.pad(ids, ((0, 0), (0, s_pad - s)))      # pad with token 0
            pos = jnp.pad(pos, ((0, s_pad - s), (0, 0)))
        ids_flat = ids.reshape(b * s_pad)

        hid_flat, proj_flat = fused_embed_layernorm_projection(
            ids_flat, self.tok_emb, pos, self.ln_gamma, self.ln_beta,
            self.proj_w, self.proj_b, batch=b, s_pad=s_pad, ts=ts,
            out_dtype=self.out_dtype)

        hidden_states = hid_flat.reshape(b, s_pad, self.model_hidden_size)[:, :s]
        projected = proj_flat.reshape(b, s_pad, self.hidden_size)[:, :s]
        # shared_projection=True: aspect == opinion == projected (dropout=eval).
        return {
            "hidden_states": hidden_states,
            "aspect_embeddings": projected,
            "opinion_embeddings": projected,
        }


if __name__ == "__main__":
    key = jax.random.PRNGKey(0)
    k_params, k_ids = jax.random.split(key)

    BATCH, SEQ = 2, 8
    VOCAB = 128
    MODEL_HIDDEN = 128      # stand-in for MiniLM hidden size
    CONFIG_HIDDEN = 128     # config.hidden_size

    module = LLMEmbeddingPallas(
        k_params, vocab_size=VOCAB, max_seq_len=SEQ,
        model_hidden_size=MODEL_HIDDEN, hidden_size=CONFIG_HIDDEN)

    input_ids = jax.random.randint(k_ids, (BATCH, SEQ), 0, VOCAB, jnp.int32)
    attention_mask = jnp.ones((BATCH, SEQ), jnp.int32)

    out = module(input_ids, attention_mask)
    jax.block_until_ready(out)

    # Plain-JAX reference of the same math (f32 throughout).
    tok = jnp.take(module.tok_emb, input_ids, axis=0)
    x = tok + module.pos_emb[:SEQ].astype(jnp.float32)[None]
    mu = x.mean(-1, keepdims=True)
    var = ((x - mu) ** 2).mean(-1, keepdims=True)
    hn_ref = (x - mu) * lax.rsqrt(var + 1e-12) * module.ln_gamma[0] \
             + module.ln_beta[0]
    proj_ref = hn_ref @ module.proj_w.astype(jnp.float32) + module.proj_b[0]

    assert out["hidden_states"].shape == (BATCH, SEQ, MODEL_HIDDEN)
    assert out["aspect_embeddings"].shape == (BATCH, SEQ, CONFIG_HIDDEN)
    assert out["opinion_embeddings"].shape == (BATCH, SEQ, CONFIG_HIDDEN)
    # bf16 outputs -> loosened tolerances (math is f32 inside the kernel).
    assert jnp.allclose(out["hidden_states"].astype(jnp.float32), hn_ref,
                        atol=3e-2, rtol=3e-2)
    assert jnp.allclose(out["aspect_embeddings"].astype(jnp.float32), proj_ref,
                        atol=5e-2, rtol=5e-2)
    assert jnp.allclose(out["aspect_embeddings"], out["opinion_embeddings"])

    print("KERNEL_OK")
</pallas_src>

<mosaic_0001>
module attributes {stable_mosaic.version = 11 : i64} {
  func.func @_embed_ln_proj_kernel(%arg0: i32, %arg1: i32, %arg2: memref<32xi32, #tpu.memory_space<smem>>, %arg3: memref<128x128xf32, #tpu.memory_space<vmem>>, %arg4: memref<16x128xbf16, #tpu.memory_space<vmem>>, %arg5: memref<1x128xf32, #tpu.memory_space<vmem>>, %arg6: memref<1x128xf32, #tpu.memory_space<vmem>>, %arg7: memref<128x128xbf16, #tpu.memory_space<vmem>>, %arg8: memref<1x128xf32, #tpu.memory_space<vmem>>, %arg9: memref<16x128xbf16, #tpu.memory_space<vmem>>, %arg10: memref<16x128xbf16, #tpu.memory_space<vmem>>, %arg11: memref<16x128xf32, #tpu.memory_space<vmem>>) attributes {dimension_semantics = [#tpu.dimension_semantics<parallel>, #tpu.dimension_semantics<parallel>], iteration_bounds = array<i64: 1, 2>, scalar_prefetch = 1 : i64, scratch_operands = 1 : i64, tpu.core_type = #tpu.core_type<tc>, window_params = [{pipeline_mode = #tpu.pipeline_mode<synchronous>, transform_indices = @transform_0, window_bounds = array<i64: 128, 128>}, {transform_indices = @transform_1, window_bounds = array<i64: 16, 128>}, {pipeline_mode = #tpu.pipeline_mode<synchronous>, transform_indices = @transform_2, window_bounds = array<i64: 1, 128>}, {pipeline_mode = #tpu.pipeline_mode<synchronous>, transform_indices = @transform_3, window_bounds = array<i64: 1, 128>}, {pipeline_mode = #tpu.pipeline_mode<synchronous>, transform_indices = @transform_4, window_bounds = array<i64: 128, 128>}, {pipeline_mode = #tpu.pipeline_mode<synchronous>, transform_indices = @transform_5, window_bounds = array<i64: 1, 128>}, {transform_indices = @transform_6, window_bounds = array<i64: 16, 128>}, {transform_indices = @transform_7, window_bounds = array<i64: 16, 128>}]} {
    %c1_i32 = arith.constant 1 : i32
    %0 = arith.muli %arg1, %c1_i32 : i32
    %1 = arith.addi %0, %arg0 : i32
    %c16_i32 = arith.constant 16 : i32
    %2 = arith.muli %1, %c16_i32 : i32
    %c0_i32 = arith.constant 0 : i32
    %c2_i32 = arith.constant 2 : i32
    %3 = arith.addi %c0_i32, %c2_i32 : i32
    %c1_i32_0 = arith.constant 1 : i32
    scf.for %arg12 = %c0_i32 to %3 step %c1_i32_0  : i32 {
      %c8_i32 = arith.constant 8 : i32
      %40 = arith.muli %arg12, %c8_i32 : i32
      %41 = tpu.assume_multiple %40, 8 : i32
      %c0_i32_22 = arith.constant 0 : i32
      %42 = arith.addi %41, %c0_i32_22 : i32
      %43 = arith.addi %2, %42 : i32
      %44 = arith.index_cast %43 : i32 to index
      %45 = memref.load %arg2[%44] : memref<32xi32, #tpu.memory_space<smem>>
      %46 = arith.index_cast %45 : i32 to index
      %c0_23 = arith.constant 0 : index
      %47 = vector.load %arg3[%46, %c0_23] : memref<128x128xf32, #tpu.memory_space<vmem>>, vector<1x128xf32>
      %48 = arith.index_cast %42 : i32 to index
      %c0_24 = arith.constant 0 : index
      %49 = vector.load %arg11[%48, %c0_24] : memref<16x128xf32, #tpu.memory_space<vmem>>, vector<1x128xf32>
      tpu.vector_store %arg11[%48, %c0_24], %47 {strides = array<i32>} : memref<16x128xf32, #tpu.memory_space<vmem>>, vector<1x128xf32>,
      %c1_i32_25 = arith.constant 1 : i32
      %50 = arith.addi %41, %c1_i32_25 : i32
      %51 = arith.addi %2, %50 : i32
      %52 = arith.index_cast %51 : i32 to index
      %53 = memref.load %arg2[%52] : memref<32xi32, #tpu.memory_space<smem>>
      %54 = arith.index_cast %53 : i32 to index
      %c0_26 = arith.constant 0 : index
      %55 = vector.load %arg3[%54, %c0_26] : memref<128x128xf32, #tpu.memory_space<vmem>>, vector<1x128xf32>
      %56 = arith.index_cast %50 : i32 to index
      %c0_27 = arith.constant 0 : index
      %57 = vector.load %arg11[%56, %c0_27] : memref<16x128xf32, #tpu.memory_space<vmem>>, vector<1x128xf32>
      tpu.vector_store %arg11[%56, %c0_27], %55 {strides = array<i32>} : memref<16x128xf32, #tpu.memory_space<vmem>>, vector<1x128xf32>,
      %c2_i32_28 = arith.constant 2 : i32
      %58 = arith.addi %41, %c2_i32_28 : i32
      %59 = arith.addi %2, %58 : i32
      %60 = arith.index_cast %59 : i32 to index
      %61 = memref.load %arg2[%60] : memref<32xi32, #tpu.memory_space<smem>>
      %62 = arith.index_cast %61 : i32 to index
      %c0_29 = arith.constant 0 : index
      %63 = vector.load %arg3[%62, %c0_29] : memref<128x128xf32, #tpu.memory_space<vmem>>, vector<1x128xf32>
      %64 = arith.index_cast %58 : i32 to index
      %c0_30 = arith.constant 0 : index
      %65 = vector.load %arg11[%64, %c0_30] : memref<16x128xf32, #tpu.memory_space<vmem>>, vector<1x128xf32>
      tpu.vector_store %arg11[%64, %c0_30], %63 {strides = array<i32>} : memref<16x128xf32, #tpu.memory_space<vmem>>, vector<1x128xf32>,
      %c3_i32 = arith.constant 3 : i32
      %66 = arith.addi %41, %c3_i32 : i32
      %67 = arith.addi %2, %66 : i32
      %68 = arith.index_cast %67 : i32 to index
      %69 = memref.load %arg2[%68] : memref<32xi32, #tpu.memory_space<smem>>
      %70 = arith.index_cast %69 : i32 to index
      %c0_31 = arith.constant 0 : index
      %71 = vector.load %arg3[%70, %c0_31] : memref<128x128xf32, #tpu.memory_space<vmem>>, vector<1x128xf32>
      %72 = arith.index_cast %66 : i32 to index
      %c0_32 = arith.constant 0 : index
      %73 = vector.load %arg11[%72, %c0_32] : memref<16x128xf32, #tpu.memory_space<vmem>>, vector<1x128xf32>
      tpu.vector_store %arg11[%72, %c0_32], %71 {strides = array<i32>} : memref<16x128xf32, #tpu.memory_space<vmem>>, vector<1x128xf32>,
      %c4_i32 = arith.constant 4 : i32
      %74 = arith.addi %41, %c4_i32 : i32
      %75 = arith.addi %2, %74 : i32
      %76 = arith.index_cast %75 : i32 to index
      %77 = memref.load %arg2[%76] : memref<32xi32, #tpu.memory_space<smem>>
      %78 = arith.index_cast %77 : i32 to index
      %c0_33 = arith.constant 0 : index
      %79 = vector.load %arg3[%78, %c0_33] : memref<128x128xf32, #tpu.memory_space<vmem>>, vector<1x128xf32>
      %80 = arith.index_cast %74 : i32 to index
      %c0_34 = arith.constant 0 : index
      %81 = vector.load %arg11[%80, %c0_34] : memref<16x128xf32, #tpu.memory_space<vmem>>, vector<1x128xf32>
      tpu.vector_store %arg11[%80, %c0_34], %79 {strides = array<i32>} : memref<16x128xf32, #tpu.memory_space<vmem>>, vector<1x128xf32>,
      %c5_i32 = arith.constant 5 : i32
      %82 = arith.addi %41, %c5_i32 : i32
      %83 = arith.addi %2, %82 : i32
      %84 = arith.index_cast %83 : i32 to index
      %85 = memref.load %arg2[%84] : memref<32xi32, #tpu.memory_space<smem>>
      %86 = arith.index_cast %85 : i32 to index
      %c0_35 = arith.constant 0 : index
      %87 = vector.load %arg3[%86, %c0_35] : memref<128x128xf32, #tpu.memory_space<vmem>>, vector<1x128xf32>
      %88 = arith.index_cast %82 : i32 to index
      %c0_36 = arith.constant 0 : index
      %89 = vector.load %arg11[%88, %c0_36] : memref<16x128xf32, #tpu.memory_space<vmem>>, vector<1x128xf32>
      tpu.vector_store %arg11[%88, %c0_36], %87 {strides = array<i32>} : memref<16x128xf32, #tpu.memory_space<vmem>>, vector<1x128xf32>,
      %c6_i32 = arith.constant 6 : i32
      %90 = arith.addi %41, %c6_i32 : i32
      %91 = arith.addi %2, %90 : i32
      %92 = arith.index_cast %91 : i32 to index
      %93 = memref.load %arg2[%92] : memref<32xi32, #tpu.memory_space<smem>>
      %94 = arith.index_cast %93 : i32 to index
      %c0_37 = arith.constant 0 : index
      %95 = vector.load %arg3[%94, %c0_37] : memref<128x128xf32, #tpu.memory_space<vmem>>, vector<1x128xf32>
      %96 = arith.index_cast %90 : i32 to index
      %c0_38 = arith.constant 0 : index
      %97 = vector.load %arg11[%96, %c0_38] : memref<16x128xf32, #tpu.memory_space<vmem>>, vector<1x128xf32>
      tpu.vector_store %arg11[%96, %c0_38], %95 {strides = array<i32>} : memref<16x128xf32, #tpu.memory_space<vmem>>, vector<1x128xf32>,
      %c7_i32 = arith.constant 7 : i32
      %98 = arith.addi %41, %c7_i32 : i32
      %99 = arith.addi %2, %98 : i32
      %100 = arith.index_cast %99 : i32 to index
      %101 = memref.load %arg2[%100] : memref<32xi32, #tpu.memory_space<smem>>
      %102 = arith.index_cast %101 : i32 to index
      %c0_39 = arith.constant 0 : index
      %103 = vector.load %arg3[%102, %c0_39] : memref<128x128xf32, #tpu.memory_space<vmem>>, vector<1x128xf32>
      %104 = arith.index_cast %98 : i32 to index
      %c0_40 = arith.constant 0 : index
      %105 = vector.load %arg11[%104, %c0_40] : memref<16x128xf32, #tpu.memory_space<vmem>>, vector<1x128xf32>
      tpu.vector_store %arg11[%104, %c0_40], %103 {strides = array<i32>} : memref<16x128xf32, #tpu.memory_space<vmem>>, vector<1x128xf32>,
    }
    %c2_i32_1 = arith.constant 2 : i32
    %c0 = arith.constant 0 : index
    %c0_2 = arith.constant 0 : index
    %4 = vector.load %arg11[%c0, %c0_2] : memref<16x128xf32, #tpu.memory_space<vmem>>, vector<16x128xf32>
    %c0_3 = arith.constant 0 : index
    %c0_4 = arith.constant 0 : index
    %5 = vector.load %arg4[%c0_3, %c0_4] : memref<16x128xbf16, #tpu.memory_space<vmem>>, vector<16x128xbf16>
    %6 = arith.extf %5 : vector<16x128xbf16> to vector<16x128xf32>
    %7 = arith.addf %4, %6 : vector<16x128xf32>
    %cst = arith.constant dense<0.000000e+00> : vector<16xf32>
    %8 = vector.multi_reduction <add>, %7, %cst [1] : vector<16x128xf32> to vector<16xf32>
    %9 = vector.shape_cast %8 : vector<16xf32> to vector<16x1xf32>
    %cst_5 = arith.constant 1.280000e+02 : f32
    %10 = vector.broadcast %cst_5 : f32 to vector<16x1xf32>
    %11 = arith.divf %9, %10 : vector<16x1xf32>
    %12 = vector.broadcast %11 : vector<16x1xf32> to vector<16x128xf32>
    %13 = arith.subf %7, %12 : vector<16x128xf32>
    %14 = arith.mulf %13, %13 : vector<16x128xf32>
    %cst_6 = arith.constant dense<0.000000e+00> : vector<16xf32>
    %15 = vector.multi_reduction <add>, %14, %cst_6 [1] : vector<16x128xf32> to vector<16xf32>
    %16 = vector.shape_cast %15 : vector<16xf32> to vector<16x1xf32>
    %cst_7 = arith.constant 1.280000e+02 : f32
    %17 = vector.broadcast %cst_7 : f32 to vector<16x1xf32>
    %18 = arith.divf %16, %17 : vector<16x1xf32>
    %cst_8 = arith.constant 9.99999996E-13 : f32
    %19 = vector.broadcast %cst_8 : f32 to vector<16x1xf32>
    %20 = arith.addf %18, %19 : vector<16x1xf32>
    %21 = math.rsqrt %20 : vector<16x1xf32>
    %c0_9 = arith.constant 0 : index
    %c0_10 = arith.constant 0 : index
    %22 = vector.load %arg5[%c0_9, %c0_10] : memref<1x128xf32, #tpu.memory_space<vmem>>, vector<1x128xf32>
    %23 = vector.broadcast %21 : vector<16x1xf32> to vector<16x128xf32>
    %24 = vector.broadcast %22 : vector<1x128xf32> to vector<16x128xf32>
    %25 = arith.mulf %23, %24 : vector<16x128xf32>
    %26 = arith.mulf %13, %25 : vector<16x128xf32>
    %c0_11 = arith.constant 0 : index
    %c0_12 = arith.constant 0 : index
    %27 = vector.load %arg6[%c0_11, %c0_12] : memref<1x128xf32, #tpu.memory_space<vmem>>, vector<1x128xf32>
    %28 = vector.broadcast %27 : vector<1x128xf32> to vector<16x128xf32>
    %29 = arith.addf %26, %28 : vector<16x128xf32>
    %30 = arith.truncf %29 : vector<16x128xf32> to vector<16x128xbf16>
    %c0_13 = arith.constant 0 : index
    %c0_14 = arith.constant 0 : index
    %31 = vector.load %arg9[%c0_13, %c0_14] : memref<16x128xbf16, #tpu.memory_space<vmem>>, vector<16x128xbf16>
    tpu.vector_store %arg9[%c0_13, %c0_14], %30 {strides = array<i32>} : memref<16x128xbf16, #tpu.memory_space<vmem>>, vector<16x128xbf16>,
    %32 = arith.truncf %29 : vector<16x128xf32> to vector<16x128xbf16>
    %c0_15 = arith.constant 0 : index
    %c0_16 = arith.constant 0 : index
    %33 = vector.load %arg7[%c0_15, %c0_16] : memref<128x128xbf16, #tpu.memory_space<vmem>>, vector<128x128xbf16>
    %cst_17 = arith.constant dense<0.000000e+00> : vector<16x128xf32>
    %34 = tpu.matmul %32, %33, %cst_17 {dimension_numbers = #tpu.dot_dimension_numbers<[1], [0], [0], [1], [0, 0, 1, 1], [], []>} : vector<16x128xbf16>, vector<128x128xbf16>, vector<16x128xf32> -> vector<16x128xf32>
    %c0_18 = arith.constant 0 : index
    %c0_19 = arith.constant 0 : index
    %35 = vector.load %arg8[%c0_18, %c0_19] : memref<1x128xf32, #tpu.memory_space<vmem>>, vector<1x128xf32>
    %36 = vector.broadcast %35 : vector<1x128xf32> to vector<16x128xf32>
    %37 = arith.addf %34, %36 : vector<16x128xf32>
    %38 = arith.truncf %37 : vector<16x128xf32> to vector<16x128xbf16>
    %c0_20 = arith.constant 0 : index
    %c0_21 = arith.constant 0 : index
    %39 = vector.load %arg10[%c0_20, %c0_21] : memref<16x128xbf16, #tpu.memory_space<vmem>>, vector<16x128xbf16>
    tpu.vector_store %arg10[%c0_20, %c0_21], %38 {strides = array<i32>} : memref<16x128xbf16, #tpu.memory_space<vmem>>, vector<16x128xbf16>,
    return
  }
  func.func @transform_0(%arg0: i32, %arg1: i32, %arg2: memref<32xi32, #tpu.memory_space<smem>>) -> (i32, i32) {
    %c0_i32 = arith.constant 0 : i32
    %c0_i32_0 = arith.constant 0 : i32
    %c0_i32_1 = arith.constant 0 : i32
    return %c0_i32, %c0_i32_0 : i32, i32
  }
  func.func @transform_1(%arg0: i32, %arg1: i32, %arg2: memref<32xi32, #tpu.memory_space<smem>>) -> (i32, i32) {
    %c0_i32 = arith.constant 0 : i32
    %c0_i32_0 = arith.constant 0 : i32
    return %arg0, %c0_i32 : i32, i32
  }
  func.func @transform_2(%arg0: i32, %arg1: i32, %arg2: memref<32xi32, #tpu.memory_space<smem>>) -> (i32, i32) {
    %c0_i32 = arith.constant 0 : i32
    %c0_i32_0 = arith.constant 0 : i32
    %c0_i32_1 = arith.constant 0 : i32
    return %c0_i32, %c0_i32_0 : i32, i32
  }
  func.func @transform_3(%arg0: i32, %arg1: i32, %arg2: memref<32xi32, #tpu.memory_space<smem>>) -> (i32, i32) {
    %c0_i32 = arith.constant 0 : i32
    %c0_i32_0 = arith.constant 0 : i32
    %c0_i32_1 = arith.constant 0 : i32
    return %c0_i32, %c0_i32_0 : i32, i32
  }
  func.func @transform_4(%arg0: i32, %arg1: i32, %arg2: memref<32xi32, #tpu.memory_space<smem>>) -> (i32, i32) {
    %c0_i32 = arith.constant 0 : i32
    %c0_i32_0 = arith.constant 0 : i32
    %c0_i32_1 = arith.constant 0 : i32
    return %c0_i32, %c0_i32_0 : i32, i32
  }
  func.func @transform_5(%arg0: i32, %arg1: i32, %arg2: memref<32xi32, #tpu.memory_space<smem>>) -> (i32, i32) {
    %c0_i32 = arith.constant 0 : i32
    %c0_i32_0 = arith.constant 0 : i32
    %c0_i32_1 = arith.constant 0 : i32
    return %c0_i32, %c0_i32_0 : i32, i32
  }
  func.func @transform_6(%arg0: i32, %arg1: i32, %arg2: memref<32xi32, #tpu.memory_space<smem>>) -> (i32, i32) {
    %c1_i32 = arith.constant 1 : i32
    %0 = arith.muli %arg1, %c1_i32 : i32
    %1 = arith.addi %0, %arg0 : i32
    %c0_i32 = arith.constant 0 : i32
    %c0_i32_0 = arith.constant 0 : i32
    return %1, %c0_i32 : i32, i32
  }
  func.func @transform_7(%arg0: i32, %arg1: i32, %arg2: memref<32xi32, #tpu.memory_space<smem>>) -> (i32, i32) {
    %c1_i32 = arith.constant 1 : i32
    %0 = arith.muli %arg1, %c1_i32 : i32
    %1 = arith.addi %0, %arg0 : i32
    %c0_i32 = arith.constant 0 : i32
    %c0_i32_0 = arith.constant 0 : i32
    return %1, %c0_i32 : i32, i32
  }
}

</mosaic_0001>

<llo_original>
// kernel: tpu_custom_call.1
$region0: #{tpu_custom_call.1}
  #allocation0 [shape = 'u32[]', space=smem, size = 0x4, offset = 0x4, fixed_abs, tag = 'smem constant byte address 0x4 - core index']
  #allocation1 [shape = 'u32[72,128]{1,0:T(1,128)}', space=vmem, size = 0x9000, scoped, tag = 'internal scratch']
  #allocation2 [shape = 'f32[16,128]{1,0:T(8,128)}', space=vmem, size = 0x2000, scoped, tag = 'scratch operand']
  #allocation3 [shape = 's32[1]{0}', space=sflag, size = 0x4, scoped, tag = 'scoped memory for tpu_custom_call.1']
  #allocation4 [shape = 'u8[512]{0}', space=smem, size = 0x200, scoped, tag = 'prefetched SMEM operand 0']
  %s0 = inlined_call_operand.hbm [shape: s32[32], index: 0, kind: input, shape index: {}]
  %s1 = inlined_call_operand.hbm [shape: f32[128,128], index: 1, kind: input, shape index: {}]
  %s2 = inlined_call_operand.hbm [shape: bf16[16,128], index: 2, kind: input, shape index: {}]
  %s3 = inlined_call_operand.vmem [shape: f32[1,128], index: 3, kind: input, shape index: {}]
  %s4 = inlined_call_operand.vmem [shape: f32[1,128], index: 4, kind: input, shape index: {}]
  %s5 = inlined_call_operand.hbm [shape: bf16[128,128], index: 5, kind: input, shape index: {}]
  %s6 = inlined_call_operand.vmem [shape: f32[1,128], index: 6, kind: input, shape index: {}]
  %s7 = inlined_call_operand.hbm [shape: bf16[32,128], index: 7, kind: output, shape index: {0}]
  %s8 = inlined_call_operand.hbm [shape: bf16[32,128], index: 8, kind: output, shape index: {1}]
  %9 = xla_tuple %s7, %s8
  %s10 = sld [smem:[#allocation0]]
  $region84: #{tpu_custom_call.1} parent=0
    _
  %s12 = ssub.s32 1, %s10
  %s13 = scalar_select 0, %s12, %s10
  %s15 = sshll.u32 %s0, 4
  %s16 = int_to_ptr.hbm [resolvable:$true] %s15
  %18 = dma.hbm_to_smem %s16, 16, [#allocation4], [#allocation3]
  %20 = dma.done [#allocation3], 16
  %21 = sfence
  $region1: #{tpu_custom_call.1} parent=0
    #allocation5 [shape = 'u8[65536]{0}', space=vmem, size = 0x10000, scoped, tag = 'input window, operand 1, single buffered']
    #allocation6 [shape = 's32[2]{0}', space=sflag, size = 0x8, scoped, tag = 'scoped memory for tpu_custom_call.1']
    #allocation7 [shape = 's32[2]{0}', space=sflag, size = 0x8, scoped, tag = 'scoped memory for tpu_custom_call.1']
    #allocation8 [shape = 'u8[4096]{0}', space=vmem, size = 0x1000, scoped, tag = 'input window, operand 2, single buffered']
    #allocation9 [shape = 's32[1]{0}', space=sflag, size = 0x4, scoped, tag = 'scoped memory for tpu_custom_call.1']
    #allocation10 [shape = 'u8[32768]{0}', space=vmem, size = 0x8000, scoped, tag = 'input window, operand 5, single buffered']
    #allocation11 [shape = 'u8[8192]{0}', space=vmem, size = 0x2000, scoped, tag = 'output window, operand 0']
    #allocation12 [shape = 'u8[8192]{0}', space=vmem, size = 0x2000, scoped, tag = 'output window, operand 1']
    #allocation13 [shape = 's32[2]{0}', space=sflag, size = 0x8, scoped, tag = 'scoped memory for tpu_custom_call.1']
    %22 = vsyncpa [#allocation6], 0
    %23 = vsyncpa [#allocation9], 0
    %24 = vsyncpa [#allocation7], 0
    %s25 = scalar_lea.sflag [#allocation7], 1
    %26 = vsyncpa %s25, 0
    %27 = vsyncpa [#allocation13], 0
    %s28 = scalar_lea.sflag [#allocation13], 1
    %29 = vsyncpa %s28, 0
    loop: start=0, step=1, limit=4
    $region2: #{tpu_custom_call.1} parent=1 // loop_pre_header
      _
    $region3: #{tpu_custom_call.1} parent=1 // loop_header
      %s31 = sphi 0, %s35
      %p32 = scmp.ge.s32.totalorder %s31, 4
      %s38 = sphi 0, %s50
      %s39 = sphi 0, %s46
      %s40 = sphi 0, %s38
      %s41 = sphi 0, %s39
      %s42 = sphi 0, %s40
      %s43 = sphi 0, %s41
      %s51 = sphi 0, %s51
      %s53 = sphi 0, %s51
      %s54 = sphi 0, %s53
      %s68 = sphi 0, %s54
      %s74 = sphi 0, %s76
      %s77 = sphi 0, %s74
      %s78 = sphi 0, %s77
      %s94 = sphi 0, %s78
      %s98 = sphi 0, %s98
      %s100 = sphi 0, %s98
      %s101 = sphi 0, %s100
      %s115 = sphi 0, %s101
      %s119 = sphi 0, %s119
      %s121 = sphi 0, %s119
      %s122 = sphi 0, %s121
      %s136 = sphi 0, %s122
      %s140 = sphi 0, %s140
      %s142 = sphi 0, %s140
      %s143 = sphi 0, %s142
      %s157 = sphi 0, %s143
      %s161 = sphi 0, %s161
      %s163 = sphi 0, %s161
      %s164 = sphi 0, %s163
      %s178 = sphi 0, %s164
      %s186 = sphi 0, %s188
      %s189 = sphi 0, %s186
      %s190 = sphi 0, %s189
      %s206 = sphi 0, %s190
      %s214 = sphi 0, %s216
      %s217 = sphi 0, %s214
      %s218 = sphi 0, %s217
      %s234 = sphi 0, %s218
    $region4: #{tpu_custom_call.1} parent=1 // loop_header_branch
      %34 = sbr.rel (%p32) target = $region8
    $region5: #{tpu_custom_call.1} parent=1 // loop_body
      %s36 = ssub.s32 %s31, 1
      %s37 = ssub.s32 %s31, 2
      %s44 = sadd.s32 1, %s39
      %p45 = scmp.ge.s32.totalorder %s44, 2
      %s46 = scalar_select %p45, 0, %s44
      %s47 = sadd.s32 1, %s38
      %s48 = scalar_select %p45, %s47, %s38
      %p49 = scmp.ge.s32.totalorder %s48, 1
      %s50 = scalar_select %p49, 0, %s48
      %s52 = sadd.s32 %s51, 1
      %p55 = scmp.eq.s32.totalorder %s31, 1
      %p56 = scmp.ne.s32.totalorder %s51, %s53
      %p57 = scmp.eq.s32.totalorder %s31, 0
      %p58 = por %p56, %p57
      %p59 = scmp.ne.s32.totalorder %s51, %s53
      %p60 = scmp.eq.s32.totalorder %s36, 1
      %p61 = por %p59, %p60
      %p62 = scmp.ne.s32.totalorder %s53, %s54
      %p63 = scmp.eq.s32.totalorder %s36, 0
      %p64 = por %p62, %p63
      %p65 = scmp.ne.s32.totalorder %s53, %s54
      %p66 = scmp.eq.s32.totalorder %s37, 1
      %p67 = por %p65, %p66
      %p69 = scmp.ne.s32.totalorder %s54, %s68
      %p70 = scmp.eq.s32.totalorder %s37, 0
      %p71 = por %p69, %p70
      %s72 = ssub.s32 %s38, %s50
      %p73 = scmp.eq.s32.totalorder %s72, 0
      %s75 = sadd.s32 %s74, 1
      %s76 = scalar_select %p73, %s74, %s75
      %p79 = pneg %p73
      %p80 = scmp.eq.s32.totalorder %s31, 1
      %p81 = por %p79, %p80
      %p82 = scmp.ne.s32.totalorder %s74, %s77
      %p83 = scmp.eq.s32.totalorder %s31, 0
      %p84 = por %p82, %p83
      %p85 = scmp.ne.s32.totalorder %s74, %s77
      %p86 = scmp.eq.s32.totalorder %s36, 1
      %p87 = por %p85, %p86
      %p88 = scmp.ne.s32.totalorder %s77, %s78
      %p89 = scmp.eq.s32.totalorder %s36, 0
      %p90 = por %p88, %p89
      %p91 = scmp.ne.s32.totalorder %s77, %s78
      %p92 = scmp.eq.s32.totalorder %s37, 1
      %p93 = por %p91, %p92
      %p95 = scmp.ne.s32.totalorder %s78, %s94
      %p96 = scmp.eq.s32.totalorder %s37, 0
      %p97 = por %p95, %p96
      %s99 = sadd.s32 %s98, 1
      %p102 = scmp.eq.s32.totalorder %s31, 1
      %p103 = scmp.ne.s32.totalorder %s98, %s100
      %p104 = scmp.eq.s32.totalorder %s31, 0
      %p105 = por %p103, %p104
      %p106 = scmp.ne.s32.totalorder %s98, %s100
      %p107 = scmp.eq.s32.totalorder %s36, 1
      %p108 = por %p106, %p107
      %p109 = scmp.ne.s32.totalorder %s100, %s101
      %p110 = scmp.eq.s32.totalorder %s36, 0
      %p111 = por %p109, %p110
      %p112 = scmp.ne.s32.totalorder %s100, %s101
      %p113 = scmp.eq.s32.totalorder %s37, 1
      %p114 = por %p112, %p113
      %p116 = scmp.ne.s32.totalorder %s101, %s115
      %p117 = scmp.eq.s32.totalorder %s37, 0
      %p118 = por %p116, %p117
      %s120 = sadd.s32 %s119, 1
      %p123 = scmp.eq.s32.totalorder %s31, 1
      %p124 = scmp.ne.s32.totalorder %s119, %s121
      %p125 = scmp.eq.s32.totalorder %s31, 0
      %p126 = por %p124, %p125
      %p127 = scmp.ne.s32.totalorder %s119, %s121
      %p128 = scmp.eq.s32.totalorder %s36, 1
      %p129 = por %p127, %p128
      %p130 = scmp.ne.s32.totalorder %s121, %s122
      %p131 = scmp.eq.s32.totalorder %s36, 0
      %p132 = por %p130, %p131
      %p133 = scmp.ne.s32.totalorder %s121, %s122
      %p134 = scmp.eq.s32.totalorder %s37, 1
      %p135 = por %p133, %p134
      %p137 = scmp.ne.s32.totalorder %s122, %s136
      %p138 = scmp.eq.s32.totalorder %s37, 0
      %p139 = por %p137, %p138
      %s141 = sadd.s32 %s140, 1
      %p144 = scmp.eq.s32.totalorder %s31, 1
      %p145 = scmp.ne.s32.totalorder %s140, %s142
      %p146 = scmp.eq.s32.totalorder %s31, 0
      %p147 = por %p145, %p146
      %p148 = scmp.ne.s32.totalorder %s140, %s142
      %p149 = scmp.eq.s32.totalorder %s36, 1
      %p150 = por %p148, %p149
      %p151 = scmp.ne.s32.totalorder %s142, %s143
      %p152 = scmp.eq.s32.totalorder %s36, 0
      %p153 = por %p151, %p152
      %p154 = scmp.ne.s32.totalorder %s142, %s143
      %p155 = scmp.eq.s32.totalorder %s37, 1
      %p156 = por %p154, %p155
      %p158 = scmp.ne.s32.totalorder %s143, %s157
      %p159 = scmp.eq.s32.totalorder %s37, 0
      %p160 = por %p158, %p159
      %s162 = sadd.s32 %s161, 1
      %p165 = scmp.eq.s32.totalorder %s31, 1
      %p166 = scmp.ne.s32.totalorder %s161, %s163
      %p167 = scmp.eq.s32.totalorder %s31, 0
      %p168 = por %p166, %p167
      %p169 = scmp.ne.s32.totalorder %s161, %s163
      %p170 = scmp.eq.s32.totalorder %s36, 1
      %p171 = por %p169, %p170
      %p172 = scmp.ne.s32.totalorder %s163, %s164
      %p173 = scmp.eq.s32.totalorder %s36, 0
      %p174 = por %p172, %p173
      %p175 = scmp.ne.s32.totalorder %s163, %s164
      %p176 = scmp.eq.s32.totalorder %s37, 1
      %p177 = por %p175, %p176
      %p179 = scmp.ne.s32.totalorder %s164, %s178
      %p180 = scmp.eq.s32.totalorder %s37, 0
      %p181 = por %p179, %p180
      %s182 = sadd.s32 %s39, %s38
      %s183 = sadd.s32 %s46, %s50
      %s184 = ssub.s32 %s182, %s183
      %p185 = scmp.eq.s32.totalorder %s184, 0
      %s187 = sadd.s32 %s186, 1
      %s188 = scalar_select %p185, %s186, %s187
      %p191 = pneg %p185
      %p192 = scmp.eq.s32.totalorder %s31, 1
      %p193 = por %p191, %p192
      %p194 = scmp.ne.s32.totalorder %s186, %s189
      %p195 = scmp.eq.s32.totalorder %s31, 0
      %p196 = por %p194, %p195
      %p197 = scmp.ne.s32.totalorder %s186, %s189
      %p198 = scmp.eq.s32.totalorder %s36, 1
      %p199 = por %p197, %p198
      %p200 = scmp.ne.s32.totalorder %s189, %s190
      %p201 = scmp.eq.s32.totalorder %s36, 0
      %p202 = por %p200, %p201
      %p203 = scmp.ne.s32.totalorder %s189, %s190
      %p204 = scmp.eq.s32.totalorder %s37, 1
      %p205 = por %p203, %p204
      %p207 = scmp.ne.s32.totalorder %s190, %s206
      %p208 = scmp.eq.s32.totalorder %s37, 0
      %p209 = por %p207, %p208
      %s210 = sadd.s32 %s39, %s38
      %s211 = sadd.s32 %s46, %s50
      %s212 = ssub.s32 %s210, %s211
      %p213 = scmp.eq.s32.totalorder %s212, 0
      %s215 = sadd.s32 %s214, 1
      %s216 = scalar_select %p213, %s214, %s215
      %p219 = pneg %p213
      %p220 = scmp.eq.s32.totalorder %s31, 1
      %p221 = por %p219, %p220
      %p222 = scmp.ne.s32.totalorder %s214, %s217
      %p223 = scmp.eq.s32.totalorder %s31, 0
      %p224 = por %p222, %p223
      %p225 = scmp.ne.s32.totalorder %s214, %s217
      %p226 = scmp.eq.s32.totalorder %s36, 1
      %p227 = por %p225, %p226
      %p228 = scmp.ne.s32.totalorder %s217, %s218
      %p229 = scmp.eq.s32.totalorder %s36, 0
      %p230 = por %p228, %p229
      %p231 = scmp.ne.s32.totalorder %s217, %s218
      %p232 = scmp.eq.s32.totalorder %s37, 1
      %p233 = por %p231, %p232
      %p235 = scmp.ne.s32.totalorder %s218, %s234
      %p236 = scmp.eq.s32.totalorder %s37, 0
      %p237 = por %p235, %p236
      %p238 = scmp.le.s32.totalorder 1, %s31
      %p239 = scmp.lt.s32.totalorder %s31, 3
      %p240 = pnand %p238, %p239
      %p241 = pneg %p240
      // Predicated region
      $region9: #{tpu_custom_call.1} parent=5 // pred_check
        _
      $region10: #{tpu_custom_call.1} parent=5 // pred_check_branch
        %243 = sbr.rel (%p240) target = $region12
      $region11: #{tpu_custom_call.1} parent=5 // pred_region
        %s244 = ssub.s32 %s31, 1
        // Predicated region
        $region13: #{tpu_custom_call.1} parent=11 // pred_check
          %p245 = pneg %p64
        $region14: #{tpu_custom_call.1} parent=11 // pred_check_branch
          %247 = sbr.rel (%p245) target = $region16
        $region15: #{tpu_custom_call.1} parent=11 // pred_region
          %249 = vsyncadd [#allocation6], 0
          %s250 = sshll.u32 %s1, 4
          %s251 = int_to_ptr.hbm [resolvable:$true] %s250
          %s252 = sshll.u32 [#allocation5], 4
          %s253 = int_to_ptr.vmem [resolvable:$true] %s252
          %258 = dma.hbm_to_vmem [thread:$0]  %s251, 2048, %s253, [#allocation6], 128, 128, 8
        $region16: #{tpu_custom_call.1} parent=11 // pred_fallthru
          _
        // Predicated region
        $region17: #{tpu_custom_call.1} parent=11 // pred_check
          %p259 = pneg %p90
        $region18: #{tpu_custom_call.1} parent=11 // pred_check_branch
          %261 = sbr.rel (%p259) target = $region20
        $region19: #{tpu_custom_call.1} parent=11 // pred_region
          %s262 = smul.u32 2, %s40
          %264 = vsyncadd [#allocation9], 0
          %s265 = smul.addr %s262, 4
          %s266 = scalar_lea.hbm %s2, %s265
          %s267 = sshll.u32 %s266, 4
          %s268 = int_to_ptr.hbm [resolvable:$true] %s267
          %s269 = sshll.u32 [#allocation8], 4
          %s270 = int_to_ptr.vmem [resolvable:$true] %s269
          %275 = dma.hbm_to_vmem [thread:$0]  %s268, 128, %s270, [#allocation9], 64, 64, 4
        $region20: #{tpu_custom_call.1} parent=11 // pred_fallthru
          _
        // Predicated region
        $region21: #{tpu_custom_call.1} parent=11 // pred_check
          %p276 = pneg %p111
        $region22: #{tpu_custom_call.1} parent=11 // pred_check_branch
          %278 = sbr.rel (%p276) target = $region24
        $region23: #{tpu_custom_call.1} parent=11 // pred_region
          _
        $region24: #{tpu_custom_call.1} parent=11 // pred_fallthru
          _
        // Predicated region
        $region25: #{tpu_custom_call.1} parent=11 // pred_check
          %p279 = pneg %p132
        $region26: #{tpu_custom_call.1} parent=11 // pred_check_branch
          %281 = sbr.rel (%p279) target = $region28
        $region27: #{tpu_custom_call.1} parent=11 // pred_region
          _
        $region28: #{tpu_custom_call.1} parent=11 // pred_fallthru
          _
        // Predicated region
        $region29: #{tpu_custom_call.1} parent=11 // pred_check
          %p282 = pneg %p153
        $region30: #{tpu_custom_call.1} parent=11 // pred_check_branch
          %284 = sbr.rel (%p282) target = $region32
        $region31: #{tpu_custom_call.1} parent=11 // pred_region
          %286 = vsyncadd [#allocation9], 0
          %s287 = sshll.u32 %s5, 4
          %s288 = int_to_ptr.hbm [resolvable:$true] %s287
          %s289 = sshll.u32 [#allocation10], 4
          %s290 = int_to_ptr.vmem [resolvable:$true] %s289
          %295 = dma.hbm_to_vmem [thread:$0]  %s288, 1024, %s290, [#allocation9], 64, 64, 4
        $region32: #{tpu_custom_call.1} parent=11 // pred_fallthru
          _
        // Predicated region
        $region33: #{tpu_custom_call.1} parent=11 // pred_check
          %p296 = pneg %p174
        $region34: #{tpu_custom_call.1} parent=11 // pred_check_branch
          %298 = sbr.rel (%p296) target = $region36
        $region35: #{tpu_custom_call.1} parent=11 // pred_region
          _
        $region36: #{tpu_custom_call.1} parent=11 // pred_fallthru
          _
      $region12: #{tpu_custom_call.1} parent=5 // pred_fallthru
        _
      %p299 = scmp.lt.s32.totalorder %s31, 2
      // Predicated region
      $region37: #{tpu_custom_call.1} parent=5 // pred_check
        %p300 = pneg %p299
      $region38: #{tpu_custom_call.1} parent=5 // pred_check_branch
        %302 = sbr.rel (%p300) target = $region40
      $region39: #{tpu_custom_call.1} parent=5 // pred_region
        _
      $region40: #{tpu_custom_call.1} parent=5 // pred_fallthru
        _
      %p303 = scmp.le.s32.totalorder 1, %s31
      %p304 = scmp.lt.s32.totalorder %s31, 3
      %p305 = pnand %p303, %p304
      %p306 = pneg %p305
      // Predicated region
      $region41: #{tpu_custom_call.1} parent=5 // pred_check
        _
      $region42: #{tpu_custom_call.1} parent=5 // pred_check_branch
        %308 = sbr.rel (%p305) target = $region44
      $region43: #{tpu_custom_call.1} parent=5 // pred_region
        %s309 = ssub.s32 %s31, 1
        // Predicated region
        $region45: #{tpu_custom_call.1} parent=43 // pred_check
          %p310 = pneg %p64
        $region46: #{tpu_custom_call.1} parent=43 // pred_check_branch
          %312 = sbr.rel (%p310) target = $region48
        $region47: #{tpu_custom_call.1} parent=43 // pred_region
          %314 = dma.done [#allocation6], 2048
        $region48: #{tpu_custom_call.1} parent=43 // pred_fallthru
          _
        // Predicated region
        $region49: #{tpu_custom_call.1} parent=43 // pred_check
          %p315 = pneg %p90
        $region50: #{tpu_custom_call.1} parent=43 // pred_check_branch
          %317 = sbr.rel (%p315) target = $region52
        $region51: #{tpu_custom_call.1} parent=43 // pred_region
          %319 = dma.done [#allocation9], 128
        $region52: #{tpu_custom_call.1} parent=43 // pred_fallthru
          _
        // Predicated region
        $region53: #{tpu_custom_call.1} parent=43 // pred_check
          %p320 = pneg %p153
        $region54: #{tpu_custom_call.1} parent=43 // pred_check_branch
          %322 = sbr.rel (%p320) target = $region56
        $region55: #{tpu_custom_call.1} parent=43 // pred_region
          %324 = dma.done [#allocation9], 1024
        $region56: #{tpu_custom_call.1} parent=43 // pred_fallthru
          _
        %p325 = pneg %p64
        %p326 = pneg %p61
        %p327 = pneg %p90
        %p328 = pneg %p87
        %p329 = pneg %p111
        %p330 = pneg %p108
        %p331 = pneg %p132
        %p332 = pneg %p129
        %p333 = pneg %p153
        %p334 = pneg %p150
        %p335 = pneg %p174
        %p336 = pneg %p171
        %p337 = pneg %p202
        %p338 = pneg %p199
        %s339 = sand.u32 %s189, 1
        %s340 = scalar_lea.sflag [#allocation7], %s339
        %s341 = sand.u32 %s189, 1
        %s342 = smul.addr %s341, 8
        %s343 = scalar_lea.vmem [#allocation11], %s342
        %p344 = pneg %p230
        %p345 = pneg %p227
        %s346 = sand.u32 %s217, 1
        %s347 = scalar_lea.sflag [#allocation13], %s346
        %s348 = sand.u32 %s217, 1
        %s349 = smul.addr %s348, 8
        %s350 = scalar_lea.vmem [#allocation12], %s349
        %s351 = smul.u32 2, %s40
        %s352 = sadd.s32 %s41, %s40
        %s353 = smul.u32 2, %s352
        %s354 = sadd.s32 %s41, %s40
        %s355 = smul.u32 2, %s354
        %s356 = sadd.s32 %s41, %s40
        %s357 = smul.u32 %s356, 16
        loop: start=0, step=1, limit=2
        $region57: #{tpu_custom_call.1} parent=43 // loop_pre_header
          _
        $region58: #{tpu_custom_call.1} parent=43 // loop_header
          %s359 = sphi 0, %s363
          %p360 = scmp.ge.s32.totalorder %s359, 2
        $region59: #{tpu_custom_call.1} parent=43 // loop_header_branch
          %362 = sbr.rel (%p360) target = $region63
        $region60: #{tpu_custom_call.1} parent=43 // loop_body
          %s364 = smul.u32 %s359, 8
          %s365 = sadd.s32 %s357, %s364
          %s366 = sld [smem:[#allocation4 + %s365]]
          %s367 = scalar_lea.vmem [#allocation5], %s366
          %v368 = vld [vmem:[%s367] sm:$0x1]
          %s369 = scalar_lea.vmem [#allocation2], %s364
          %370 = vst [vmem:[%s369] sm:$0x1] %v368
          %s371 = sadd.s32 %s364, 1
          %s372 = sadd.s32 %s357, %s371
          %s373 = sld [smem:[#allocation4 + %s372]]
          %s374 = scalar_lea.vmem [#allocation5], %s373
          %v375 = vld [vmem:[%s374] sm:$0x1]
          %s376 = scalar_lea.vmem [#allocation2], %s371
          %377 = vst [vmem:[%s376] sm:$0x1] %v375
          %s378 = sadd.s32 %s364, 2
          %s379 = sadd.s32 %s357, %s378
          %s380 = sld [smem:[#allocation4 + %s379]]
          %s381 = scalar_lea.vmem [#allocation5], %s380
          %v382 = vld [vmem:[%s381] sm:$0x1]
          %s383 = scalar_lea.vmem [#allocation2], %s378
          %384 = vst [vmem:[%s383] sm:$0x1] %v382
          %s385 = sadd.s32 %s364, 3
          %s386 = sadd.s32 %s357, %s385
          %s387 = sld [smem:[#allocation4 + %s386]]
          %s388 = scalar_lea.vmem [#allocation5], %s387
          %v389 = vld [vmem:[%s388] sm:$0x1]
          %s390 = scalar_lea.vmem [#allocation2], %s385
          %391 = vst [vmem:[%s390] sm:$0x1] %v389
          %s392 = sadd.s32 %s364, 4
          %s393 = sadd.s32 %s357, %s392
          %s394 = sld [smem:[#allocation4 + %s393]]
          %s395 = scalar_lea.vmem [#allocation5], %s394
          %v396 = vld [vmem:[%s395] sm:$0x1]
          %s397 = scalar_lea.vmem [#allocation2], %s392
          %398 = vst [vmem:[%s397] sm:$0x1] %v396
          %s399 = sadd.s32 %s364, 5
          %s400 = sadd.s32 %s357, %s399
          %s401 = sld [smem:[#allocation4 + %s400]]
          %s402 = scalar_lea.vmem [#allocation5], %s401
          %v403 = vld [vmem:[%s402] sm:$0x1]
          %s404 = scalar_lea.vmem [#allocation2], %s399
          %405 = vst [vmem:[%s404] sm:$0x1] %v403
          %s406 = sadd.s32 %s364, 6
          %s407 = sadd.s32 %s357, %s406
          %s408 = sld [smem:[#allocation4 + %s407]]
          %s409 = scalar_lea.vmem [#allocation5], %s408
          %v410 = vld [vmem:[%s409] sm:$0x1]
          %s411 = scalar_lea.vmem [#allocation2], %s406
          %412 = vst [vmem:[%s411] sm:$0x1] %v410
          %s413 = sadd.s32 %s364, 7
          %s414 = sadd.s32 %s357, %s413
          %s415 = sld [smem:[#allocation4 + %s414]]
          %s416 = scalar_lea.vmem [#allocation5], %s415
          %v417 = vld [vmem:[%s416] sm:$0x1]
          %s418 = scalar_lea.vmem [#allocation2], %s413
          %419 = vst [vmem:[%s418] sm:$0x1] %v417
        $region61: #{tpu_custom_call.1} parent=43 // loop_footer
          %s363 = sadd.s32 1, %s359
        $region62: #{tpu_custom_call.1} parent=43 // loop_footer_branch
          %358 = sbr.rel target = $region58
        $region63: #{tpu_custom_call.1} parent=43 // loop_exit
          _
        %v420 = vld [vmem:[#allocation2] sm:$0xff]
        %v421 = vld [vmem:[#allocation2 + $0x8] sm:$0xff]
        %v422 = vld [vmem:[#allocation8] sm:$0xf]
        %v423 = vld [vmem:[#allocation8 + $0x4] sm:$0xf]
        %v424 = vunpack.c.l.bf16 %v422
        %v425 = vunpack.c.l.bf16 %v423
        %v426 = vadd.f32 %v420, %v424
        %v427 = vadd.f32 %v421, %v425
        %428 = vadd.xlane.f32.xlu0 %v426
        %v429 = vpop.xlane.xlu0 %428
        %430 = vadd.xlane.f32.xlu0 %v427
        %v431 = vpop.xlane.xlu0 %430
        %v432 = vrcp.pop 128.0
        %v433 = vmul.f32 128.0, %v432
        %v434 = vsub.f32 1.0, %v433
        %v435 = vmul.f32 %v432, %v434
        %v436 = vadd.f32 %v432, %v435
        %vm437 = vweird.f32 %v432
        %v438 = vsel %vm437, %v432, %v436
        %v439 = vmul.f32 %v429, %v438
        %v440 = vmul.f32 %v431, %v438
        %v441 = vsub.f32 %v426, %v439
        %v442 = vsub.f32 %v427, %v440
        %v443 = vmul.f32 %v441, %v441
        %v444 = vmul.f32 %v442, %v442
        %445 = vadd.xlane.f32.xlu0 %v443
        %v446 = vpop.xlane.xlu0 %445
        %447 = vadd.xlane.f32.xlu0 %v444
        %v448 = vpop.xlane.xlu0 %447
        %v449 = vmul.f32 %v446, %v438
        %v450 = vmul.f32 %v448, %v438
        %v451 = vadd.f32 %v449, 1e-12
        %v452 = vadd.f32 %v450, 1e-12
        %v453 = vrsqrt.pop %v451
        %v454 = vmul.f32 %v453, %v451
        %v455 = vmul.f32 %v454, %v453
        %v456 = vmul.f32 0.5, %v455
        %v457 = vsub.f32 1.5, %v456
        %v458 = vmul.f32 %v453, %v457
        %vm459 = vweird.f32 %v451
        %vm460 = vweird.f32 %v453
        %vm461 = vmor %vm459, %vm460
        %v462 = vsel %vm461, %v453, %v458
        %v463 = vrsqrt.pop %v452
        %v464 = vmul.f32 %v463, %v452
        %v465 = vmul.f32 %v464, %v463
        %v466 = vmul.f32 0.5, %v465
        %v467 = vsub.f32 1.5, %v466
        %v468 = vmul.f32 %v463, %v467
        %vm469 = vweird.f32 %v452
        %vm470 = vweird.f32 %v463
        %vm471 = vmor %vm469, %vm470
        %v472 = vsel %vm471, %v463, %v468
        %v473 = vld [vmem:[%s3] sm:$0x1]
        %v475 = vperm.slane %v473, 0
        %v477 = vmul.f32 %v462, %v475
        %v478 = vmul.f32 %v472, %v475
        %v479 = vmul.f32 %v441, %v477
        %v480 = vmul.f32 %v442, %v478
        %v481 = vld [vmem:[%s4] sm:$0x1]
        %v483 = vperm.slane %v481, 0
        %v485 = vadd.f32 %v479, %v483
        %v486 = vadd.f32 %v480, %v483
        %v487 = vpack.c.bf16 %v485, %v485
        %v488 = vpack.c.bf16 %v486, %v486
        %489 = vst [vmem:[%s343] sm:$0xf] %v487
        %490 = vst [vmem:[%s343 + $0x4] sm:$0xf] %v488
        %v491 = vld [vmem:[#allocation10] sm:$0xf]
        %v492 = vld [vmem:[#allocation10 + $0x4] sm:$0xf]
        %v493 = vld [vmem:[#allocation10 + $0x8] sm:$0xf]
        %v494 = vld [vmem:[#allocation10 + $0xc] sm:$0xf]
        %v495 = vld [vmem:[#allocation10 + $0x10] sm:$0xf]
        %v496 = vld [vmem:[#allocation10 + $0x14] sm:$0xf]
        %v497 = vld [vmem:[#allocation10 + $0x18] sm:$0xf]
        %v498 = vld [vmem:[#allocation10 + $0x1c] sm:$0xf]
        %v499 = vld [vmem:[#allocation10 + $0x20] sm:$0xf]
        %v500 = vld [vmem:[#allocation10 + $0x24] sm:$0xf]
        %v501 = vld [vmem:[#allocation10 + $0x28] sm:$0xf]
        %v502 = vld [vmem:[#allocation10 + $0x2c] sm:$0xf]
        %v503 = vld [vmem:[#allocation10 + $0x30] sm:$0xf]
        %v504 = vld [vmem:[#allocation10 + $0x34] sm:$0xf]
        %v505 = vld [vmem:[#allocation10 + $0x38] sm:$0xf]
        %v506 = vld [vmem:[#allocation10 + $0x3c] sm:$0xf]
        %v507 = vld [vmem:[%s6] sm:$0x1]
        %v509 = vperm.slane %v507, 0
        %v513 = vunpack.c.l.b16 %v487
        %v514 = vunpack.c.l.b16 %v488
        %v515 = vpack.c.b16 %v514, %v513
        %v533 = vunpack.c.l.b16 %v491
        %v534 = vunpack.c.l.b16 %v492
        %v535 = vunpack.c.l.b16 %v493
        %v536 = vunpack.c.l.b16 %v494
        %v537 = vunpack.c.l.b16 %v495
        %v538 = vunpack.c.l.b16 %v496
        %v539 = vunpack.c.l.b16 %v497
        %v540 = vunpack.c.l.b16 %v498
        %v541 = vunpack.c.l.b16 %v499
        %v542 = vunpack.c.l.b16 %v500
        %v543 = vunpack.c.l.b16 %v501
        %v544 = vunpack.c.l.b16 %v502
        %v545 = vunpack.c.l.b16 %v503
        %v546 = vunpack.c.l.b16 %v504
        %v547 = vunpack.c.l.b16 %v505
        %v548 = vunpack.c.l.b16 %v506
        %v549 = vpack.c.b16 %v534, %v533
        %v550 = vpack.c.b16 %v536, %v535
        %v551 = vpack.c.b16 %v538, %v537
        %v552 = vpack.c.b16 %v540, %v539
        %v553 = vpack.c.b16 %v542, %v541
        %v554 = vpack.c.b16 %v544, %v543
        %v555 = vpack.c.b16 %v546, %v545
        %v556 = vpack.c.b16 %v548, %v547
        %565 = vmatpush.bf16.msra.mxu0 %v556
        %566 = vmatpush.bf16.msra.mxu0 %v555
        %567 = vmatpush.bf16.msra.mxu0 %v554
        %568 = vmatpush.bf16.msra.mxu0 %v553
        %569 = vmatpush.bf16.msra.mxu0 %v552
        %570 = vmatpush.bf16.msra.mxu0 %v551
        %571 = vmatpush.bf16.msra.mxu0 %v550
        %572 = vmatpush.bf16.msra.mxu0 %v549
        %573 = vmatmul.bf16.gmra.mxu0 %v515
        %v574 = vpop.f32.mrf.mxu0
        %v575 = vadd.f32 %v509, %v574
        %v576 = vpop.f32.mrf.mxu0
        %v577 = vadd.f32 %v509, %v576
        %578 = vdwg.mxu0
        %v579 = vpack.c.bf16 %v575, %v575
        %v580 = vpack.c.bf16 %v577, %v577
        %581 = vst [vmem:[%s350] sm:$0xf] %v579
        %582 = vst [vmem:[%s350 + $0x4] sm:$0xf] %v580
        %s583 = sand.u32 %s189, 1
        %s584 = scalar_lea.sflag [#allocation7], %s583
        %s585 = sand.u32 %s189, 1
        %s586 = smul.addr %s585, 8
        %s587 = scalar_lea.vmem [#allocation11], %s586
        %s588 = sand.u32 %s217, 1
        %s589 = scalar_lea.sflag [#allocation13], %s588
        %s590 = sand.u32 %s217, 1
        %s591 = smul.addr %s590, 8
        %s592 = scalar_lea.vmem [#allocation12], %s591
        // Predicated region
        $region64: #{tpu_custom_call.1} parent=43 // pred_check
          %p593 = pneg %p199
        $region65: #{tpu_custom_call.1} parent=43 // pred_check_branch
          %595 = sbr.rel (%p593) target = $region67
        $region66: #{tpu_custom_call.1} parent=43 // pred_region
          %s596 = sadd.s32 %s41, %s40
          %s597 = smul.u32 2, %s596
          %599 = vsyncadd %s584, 0
          %s600 = smul.addr %s597, 4
          %s601 = scalar_lea.hbm %s7, %s600
          %s602 = sshll.u32 %s587, 4
          %s603 = int_to_ptr.vmem [resolvable:$true] %s602
          %s604 = sshll.u32 %s601, 4
          %s605 = int_to_ptr.hbm [resolvable:$true] %s604
          %610 = dma.vmem_to_hbm [thread:$0]  %s603, 128, %s605, %s584, 64, 64, 4
        $region67: #{tpu_custom_call.1} parent=43 // pred_fallthru
          _
        // Predicated region
        $region68: #{tpu_custom_call.1} parent=43 // pred_check
          %p611 = pneg %p227
        $region69: #{tpu_custom_call.1} parent=43 // pred_check_branch
          %613 = sbr.rel (%p611) target = $region71
        $region70: #{tpu_custom_call.1} parent=43 // pred_region
          %s614 = sadd.s32 %s41, %s40
          %s615 = smul.u32 2, %s614
          %617 = vsyncadd %s589, 0
          %s618 = smul.addr %s615, 4
          %s619 = scalar_lea.hbm %s8, %s618
          %s620 = sshll.u32 %s592, 4
          %s621 = int_to_ptr.vmem [resolvable:$true] %s620
          %s622 = sshll.u32 %s619, 4
          %s623 = int_to_ptr.hbm [resolvable:$true] %s622
          %628 = dma.vmem_to_hbm [thread:$0]  %s621, 128, %s623, %s589, 64, 64, 4
        $region71: #{tpu_custom_call.1} parent=43 // pred_fallthru
          _
      $region44: #{tpu_custom_call.1} parent=5 // pred_fallthru
        _
      %p629 = scmp.le.s32.totalorder 2, %s31
      // Predicated region
      $region72: #{tpu_custom_call.1} parent=5 // pred_check
        %p630 = pneg %p629
      $region73: #{tpu_custom_call.1} parent=5 // pred_check_branch
        %632 = sbr.rel (%p630) target = $region75
      $region74: #{tpu_custom_call.1} parent=5 // pred_region
        %s633 = ssub.s32 %s31, 2
        // Predicated region
        $region76: #{tpu_custom_call.1} parent=74 // pred_check
          %p634 = pneg %p205
        $region77: #{tpu_custom_call.1} parent=74 // pred_check_branch
          %636 = sbr.rel (%p634) target = $region79
        $region78: #{tpu_custom_call.1} parent=74 // pred_region
          %s637 = sand.u32 %s190, 1
          %s638 = scalar_lea.sflag [#allocation7], %s637
          %s639 = sand.u32 %s190, 1
          %s640 = smul.addr %s639, 8
          %s641 = scalar_lea.vmem [#allocation11], %s640
          %643 = dma.done %s638, 128
        $region79: #{tpu_custom_call.1} parent=74 // pred_fallthru
          _
        // Predicated region
        $region80: #{tpu_custom_call.1} parent=74 // pred_check
          %p644 = pneg %p233
        $region81: #{tpu_custom_call.1} parent=74 // pred_check_branch
          %646 = sbr.rel (%p644) target = $region83
        $region82: #{tpu_custom_call.1} parent=74 // pred_region
          %s647 = sand.u32 %s218, 1
          %s648 = scalar_lea.sflag [#allocation13], %s647
          %s649 = sand.u32 %s218, 1
          %s650 = smul.addr %s649, 8
          %s651 = scalar_lea.vmem [#allocation12], %s650
          %653 = dma.done %s648, 128
        $region83: #{tpu_custom_call.1} parent=74 // pred_fallthru
          _
      $region75: #{tpu_custom_call.1} parent=5 // pred_fallthru
        _
    $region6: #{tpu_custom_call.1} parent=1 // loop_footer
      %s35 = sadd.s32 1, %s31
    $region7: #{tpu_custom_call.1} parent=1 // loop_footer_branch
      %30 = sbr.rel target = $region3
    $region8: #{tpu_custom_call.1} parent=1 // loop_exit
      _
    %654 = vsyncpa [#allocation6], 1
    %s655 = scalar_lea.sflag [#allocation6], 1
    %656 = vsyncpa %s655, 1
    %657 = vsyncpa [#allocation9], 1
    %658 = vsyncpa [#allocation7], 1
    %s659 = scalar_lea.sflag [#allocation7], 1
    %660 = vsyncpa %s659, 1
    %661 = vsyncpa [#allocation13], 1
    %s662 = scalar_lea.sflag [#allocation13], 1
    %663 = vsyncpa %s662, 1

</llo_original>
